<compile_context>
chip_gen: v6e
topology: v6e:2x2x1
jax: 0.10.0
libtpu: 0.0.40
codegen_flags: <defaults>
</compile_context>

<pallas_src>
import functools

import jax
import jax.numpy as jnp
from jax.experimental import pallas as pl
from jax.experimental.pallas import tpu as pltpu

LN_EPS = 1e-5  # torch.nn.LayerNorm default


def _round_up(x, m):
    return ((x + m - 1) // m) * m


def _linear_layernorm_kernel(x_ref, w_ref, g_ref, b_ref, o_ref, acc_ref, *, n_real):
    # x_ref: (tm, tk) bf16, w_ref: (tk, Npad) bf16, g_ref/b_ref: (1, Npad) f32,
    # o_ref: (tm, Npad), acc_ref: (tm, Npad) f32 scratch (resident across the K axis).
    k = pl.program_id(1)

    @pl.when(k == 0)
    def _init():
        acc_ref[...] = jnp.zeros_like(acc_ref)

    acc_ref[...] += jnp.dot(
        x_ref[...], w_ref[...], preferred_element_type=jnp.float32
    )

    @pl.when(k == pl.num_programs(1) - 1)
    def _finalize():
        y = acc_ref[...]                       # f32, (tm, Npad)
        n_pad = y.shape[-1]
        inv_n = 1.0 / float(n_real)
        if n_pad == n_real:
            mean = jnp.sum(y, axis=-1, keepdims=True) * inv_n
            centered = y - mean
        else:
            # Padded output columns are exactly zero (zero-padded weights); mask them out
            # of the LayerNorm statistics so the math matches the unpadded layer.
            col = jax.lax.broadcasted_iota(jnp.int32, y.shape, dimension=1)
            mask = col < n_real
            mean = jnp.sum(jnp.where(mask, y, 0.0), axis=-1, keepdims=True) * inv_n
            centered = jnp.where(mask, y - mean, 0.0)
        var = jnp.sum(centered * centered, axis=-1, keepdims=True) * inv_n  # biased (torch)
        y_hat = centered * jax.lax.rsqrt(var + LN_EPS)                      # EUP rsqrt
        out = y_hat * g_ref[...] + b_ref[...]
        o_ref[...] = out.astype(o_ref.dtype)


def prepare_linear_layernorm_params(weight, gamma, beta, *, matmul_dtype=jnp.bfloat16):
    """One-time parameter prep (hoisted out of the per-step path).

    weight: [out_features, in_features] (torch nn.Linear layout).
    Returns (w_t_padded [Kpad, Npad] in matmul_dtype, gamma_padded [1, Npad] f32,
             beta_padded [1, Npad] f32, out_features).
    """
    out_features, in_features = weight.shape
    n_pad = _round_up(out_features, 128)   # lane-dense output stores
    k_pad = _round_up(in_features, 128)    # full MXU contraction tiles

    w_t = jnp.transpose(weight).astype(matmul_dtype)            # (K, N), transposed once
    w_t = jnp.pad(w_t, ((0, k_pad - in_features), (0, n_pad - out_features)))
    g = jnp.pad(gamma.astype(jnp.float32).reshape(1, -1),
                ((0, 0), (0, n_pad - out_features)))
    b = jnp.pad(beta.astype(jnp.float32).reshape(1, -1),
                ((0, 0), (0, n_pad - out_features)))
    return w_t, g, b, out_features


def linear_layernorm(x, w_t, gamma_pad, beta_pad, n_real, *,
                     tm=256, matmul_dtype=jnp.bfloat16):
    """x: [..., in_features]; w_t/gamma_pad/beta_pad from prepare_linear_layernorm_params."""
    orig_shape = x.shape
    in_features = orig_shape[-1]
    k_pad, n_pad = w_t.shape

    x2d = x.reshape(-1, in_features)
    m = x2d.shape[0]

    # Row tile: as large as possible up to tm (MXU-friendly), multiple of 8.
    tm_eff = min(tm, _round_up(m, 8))
    m_pad = _round_up(m, tm_eff)

    # K tile: biggest power-of-two slab (<=512) that divides the padded K.
    tk = 128
    for cand in (512, 256, 128):
        if k_pad % cand == 0:
            tk = cand
            break

    # Pad rows / contraction dim with zeros; cast matmul operands to bf16.
    x2d = jnp.pad(x2d, ((0, m_pad - m), (0, k_pad - in_features))).astype(matmul_dtype)

    grid = (m_pad // tm_eff, k_pad // tk)
    out_dtype = x.dtype

    # VMEM budget: double-buffered x / w / out tiles + f32 accumulator + gamma/beta.
    mm_bytes = jnp.dtype(matmul_dtype).itemsize
    out_bytes = jnp.dtype(out_dtype).itemsize
    vmem_needed = (2 * tm_eff * tk * mm_bytes
                   + 2 * tk * n_pad * mm_bytes
                   + 2 * tm_eff * n_pad * out_bytes
                   + tm_eff * n_pad * 4
                   + 2 * 2 * n_pad * 4)
    vmem_limit = min(max(2 * vmem_needed + (4 << 20), 16 << 20), 64 << 20)

    kernel = functools.partial(_linear_layernorm_kernel, n_real=n_real)

    out2d = pl.pallas_call(
        kernel,
        out_shape=jax.ShapeDtypeStruct((m_pad, n_pad), out_dtype),
        grid_spec=pltpu.PrefetchScalarGridSpec(
            num_scalar_prefetch=0,
            grid=grid,
            in_specs=[
                pl.BlockSpec((tm_eff, tk), lambda i, k: (i, k)),
                pl.BlockSpec((tk, n_pad), lambda i, k: (k, 0)),
                pl.BlockSpec((1, n_pad), lambda i, k: (0, 0)),
                pl.BlockSpec((1, n_pad), lambda i, k: (0, 0)),
            ],
            out_specs=pl.BlockSpec((tm_eff, n_pad), lambda i, k: (i, 0)),
            scratch_shapes=[pltpu.VMEM((tm_eff, n_pad), jnp.float32)],
        ),
        compiler_params=pltpu.CompilerParams(
            dimension_semantics=("parallel", "arbitrary"),
            vmem_limit_bytes=int(vmem_limit),
        ),
    )(x2d, w_t, gamma_pad, beta_pad)

    out2d = out2d[:m, :n_real]
    return out2d.reshape(*orig_shape[:-1], n_real)


if __name__ == "__main__":
    batch, seq = 2, 8
    in_features, out_features = 32, 64

    key = jax.random.PRNGKey(0)
    kx, kw, kg, kb = jax.random.split(key, 4)

    x = jax.random.normal(kx, (batch, seq, in_features), dtype=jnp.float32)
    weight = jax.random.normal(kw, (out_features, in_features), dtype=jnp.float32) * 0.1
    gamma = 1.0 + 0.1 * jax.random.normal(kg, (out_features,), dtype=jnp.float32)
    beta = 0.05 * jax.random.normal(kb, (out_features,), dtype=jnp.float32)

    # One-time param prep (transpose / bf16 cast / lane padding hoisted out of the step).
    w_t, g_pad, b_pad, n_real = prepare_linear_layernorm_params(weight, gamma, beta)

    out = linear_layernorm(x, w_t, g_pad, b_pad, n_real)
    jax.block_until_ready(out)

    # Reference with the same bf16 matmul operands (f32 accumulation + f32 LayerNorm).
    xb = x.reshape(-1, in_features).astype(jnp.bfloat16)
    wb = weight.T.astype(jnp.bfloat16)
    y_ref = jax.lax.dot_general(
        xb, wb, (((1,), (0,)), ((), ())), preferred_element_type=jnp.float32
    ).reshape(batch, seq, out_features)
    mu = y_ref.mean(-1, keepdims=True)
    var = ((y_ref - mu) ** 2).mean(-1, keepdims=True)
    ref = (y_ref - mu) * jax.lax.rsqrt(var + LN_EPS) * gamma + beta

    assert out.shape == (batch, seq, out_features)
    assert jnp.allclose(out, ref, atol=2e-3, rtol=2e-3), (
        float(jnp.max(jnp.abs(out - ref))))

    print("KERNEL_OK")
</pallas_src>

<mosaic_0001>
module attributes {stable_mosaic.version = 11 : i64} {
  func.func @_linear_layernorm_kernel(%arg0: i32, %arg1: i32, %arg2: memref<16x128xbf16, #tpu.memory_space<vmem>>, %arg3: memref<128x128xbf16, #tpu.memory_space<vmem>>, %arg4: memref<1x128xf32, #tpu.memory_space<vmem>>, %arg5: memref<1x128xf32, #tpu.memory_space<vmem>>, %arg6: memref<16x128xf32, #tpu.memory_space<vmem>>, %arg7: memref<16x128xf32, #tpu.memory_space<vmem>>) attributes {dimension_semantics = [#tpu.dimension_semantics<parallel>, #tpu.dimension_semantics<arbitrary>], iteration_bounds = array<i64: 1, 1>, scalar_prefetch = 0 : i64, scratch_operands = 1 : i64, tpu.core_type = #tpu.core_type<tc>, window_params = [{transform_indices = @transform_0, window_bounds = array<i64: 16, 128>}, {transform_indices = @transform_1, window_bounds = array<i64: 128, 128>}, {pipeline_mode = #tpu.pipeline_mode<synchronous>, transform_indices = @transform_2, window_bounds = array<i64: 1, 128>}, {pipeline_mode = #tpu.pipeline_mode<synchronous>, transform_indices = @transform_3, window_bounds = array<i64: 1, 128>}, {transform_indices = @transform_4, window_bounds = array<i64: 16, 128>}]} {
    %c0_i32 = arith.constant 0 : i32
    %0 = arith.cmpi eq, %arg1, %c0_i32 : i32
    %1 = arith.extui %0 : i1 to i32
    %c0_i32_0 = arith.constant 0 : i32
    %2 = arith.cmpi ne, %1, %c0_i32_0 : i32
    scf.if %2 {
      %cst_10 = arith.constant 0.000000e+00 : f32
      %12 = vector.broadcast %cst_10 : f32 to vector<16x128xf32>
      %c0_11 = arith.constant 0 : index
      %c0_12 = arith.constant 0 : index
      %13 = vector.load %arg7[%c0_11, %c0_12] : memref<16x128xf32, #tpu.memory_space<vmem>>, vector<16x128xf32>
      tpu.vector_store %arg7[%c0_11, %c0_12], %12 {strides = array<i32>} : memref<16x128xf32, #tpu.memory_space<vmem>>, vector<16x128xf32>,
    } else {
    }
    %c0 = arith.constant 0 : index
    %c0_1 = arith.constant 0 : index
    %3 = vector.load %arg7[%c0, %c0_1] : memref<16x128xf32, #tpu.memory_space<vmem>>, vector<16x128xf32>
    %c0_2 = arith.constant 0 : index
    %c0_3 = arith.constant 0 : index
    %4 = vector.load %arg2[%c0_2, %c0_3] : memref<16x128xbf16, #tpu.memory_space<vmem>>, vector<16x128xbf16>
    %c0_4 = arith.constant 0 : index
    %c0_5 = arith.constant 0 : index
    %5 = vector.load %arg3[%c0_4, %c0_5] : memref<128x128xbf16, #tpu.memory_space<vmem>>, vector<128x128xbf16>
    %cst = arith.constant dense<0.000000e+00> : vector<16x128xf32>
    %6 = tpu.matmul %4, %5, %cst {dimension_numbers = #tpu.dot_dimension_numbers<[1], [0], [0], [1], [0, 0, 1, 1], [], []>} : vector<16x128xbf16>, vector<128x128xbf16>, vector<16x128xf32> -> vector<16x128xf32>
    %7 = arith.addf %3, %6 : vector<16x128xf32>
    %c0_6 = arith.constant 0 : index
    %c0_7 = arith.constant 0 : index
    %8 = vector.load %arg7[%c0_6, %c0_7] : memref<16x128xf32, #tpu.memory_space<vmem>>, vector<16x128xf32>
    tpu.vector_store %arg7[%c0_6, %c0_7], %7 {strides = array<i32>} : memref<16x128xf32, #tpu.memory_space<vmem>>, vector<16x128xf32>,
    %c0_i32_8 = arith.constant 0 : i32
    %9 = arith.cmpi eq, %arg1, %c0_i32_8 : i32
    %10 = arith.extui %9 : i1 to i32
    %c0_i32_9 = arith.constant 0 : i32
    %11 = arith.cmpi ne, %10, %c0_i32_9 : i32
    scf.if %11 {
      %c0_10 = arith.constant 0 : index
      %c0_11 = arith.constant 0 : index
      %12 = vector.load %arg7[%c0_10, %c0_11] : memref<16x128xf32, #tpu.memory_space<vmem>>, vector<16x128xf32>
      %13 = tpu.iota {dimensions = array<i32: 1>} : vector<16x128xi32>
      %c64_i32 = arith.constant 64 : i32
      %14 = vector.broadcast %c64_i32 : i32 to vector<16x128xi32>
      %15 = arith.cmpi slt, %13, %14 : vector<16x128xi32>
      %cst_12 = arith.constant 0.000000e+00 : f32
      %16 = vector.broadcast %cst_12 : f32 to vector<16x128xf32>
      %17 = arith.select %15, %12, %16 : vector<16x128xi1>, vector<16x128xf32>
      %cst_13 = arith.constant dense<0.000000e+00> : vector<16xf32>
      %18 = vector.multi_reduction <add>, %17, %cst_13 [1] : vector<16x128xf32> to vector<16xf32>
      %19 = vector.shape_cast %18 : vector<16xf32> to vector<16x1xf32>
      %cst_14 = arith.constant 1.562500e-02 : f32
      %20 = vector.broadcast %cst_14 : f32 to vector<16x1xf32>
      %21 = arith.mulf %19, %20 : vector<16x1xf32>
      %22 = vector.broadcast %21 : vector<16x1xf32> to vector<16x128xf32>
      %23 = arith.subf %12, %22 : vector<16x128xf32>
      %cst_15 = arith.constant 0.000000e+00 : f32
      %24 = vector.broadcast %cst_15 : f32 to vector<16x128xf32>
      %25 = arith.select %15, %23, %24 : vector<16x128xi1>, vector<16x128xf32>
      %26 = arith.mulf %25, %25 : vector<16x128xf32>
      %cst_16 = arith.constant dense<0.000000e+00> : vector<16xf32>
      %27 = vector.multi_reduction <add>, %26, %cst_16 [1] : vector<16x128xf32> to vector<16xf32>
      %28 = vector.shape_cast %27 : vector<16xf32> to vector<16x1xf32>
      %cst_17 = arith.constant 1.562500e-02 : f32
      %29 = vector.broadcast %cst_17 : f32 to vector<16x1xf32>
      %30 = arith.mulf %28, %29 : vector<16x1xf32>
      %cst_18 = arith.constant 9.99999974E-6 : f32
      %31 = vector.broadcast %cst_18 : f32 to vector<16x1xf32>
      %32 = arith.addf %30, %31 : vector<16x1xf32>
      %33 = math.rsqrt %32 : vector<16x1xf32>
      %34 = vector.broadcast %33 : vector<16x1xf32> to vector<16x128xf32>
      %35 = arith.mulf %25, %34 : vector<16x128xf32>
      %c0_19 = arith.constant 0 : index
      %c0_20 = arith.constant 0 : index
      %36 = vector.load %arg4[%c0_19, %c0_20] : memref<1x128xf32, #tpu.memory_space<vmem>>, vector<1x128xf32>
      %37 = vector.broadcast %36 : vector<1x128xf32> to vector<16x128xf32>
      %38 = arith.mulf %35, %37 : vector<16x128xf32>
      %c0_21 = arith.constant 0 : index
      %c0_22 = arith.constant 0 : index
      %39 = vector.load %arg5[%c0_21, %c0_22] : memref<1x128xf32, #tpu.memory_space<vmem>>, vector<1x128xf32>
      %40 = vector.broadcast %39 : vector<1x128xf32> to vector<16x128xf32>
      %41 = arith.addf %38, %40 : vector<16x128xf32>
      %c0_23 = arith.constant 0 : index
      %c0_24 = arith.constant 0 : index
      %42 = vector.load %arg6[%c0_23, %c0_24] : memref<16x128xf32, #tpu.memory_space<vmem>>, vector<16x128xf32>
      tpu.vector_store %arg6[%c0_23, %c0_24], %41 {strides = array<i32>} : memref<16x128xf32, #tpu.memory_space<vmem>>, vector<16x128xf32>,
    } else {
    }
    return
  }
  func.func @transform_0(%arg0: i32, %arg1: i32) -> (i32, i32) {
    %c0_i32 = arith.constant 0 : i32
    return %arg0, %arg1 : i32, i32
  }
  func.func @transform_1(%arg0: i32, %arg1: i32) -> (i32, i32) {
    %c0_i32 = arith.constant 0 : i32
    %c0_i32_0 = arith.constant 0 : i32
    return %arg1, %c0_i32 : i32, i32
  }
  func.func @transform_2(%arg0: i32, %arg1: i32) -> (i32, i32) {
    %c0_i32 = arith.constant 0 : i32
    %c0_i32_0 = arith.constant 0 : i32
    %c0_i32_1 = arith.constant 0 : i32
    return %c0_i32, %c0_i32_0 : i32, i32
  }
  func.func @transform_3(%arg0: i32, %arg1: i32) -> (i32, i32) {
    %c0_i32 = arith.constant 0 : i32
    %c0_i32_0 = arith.constant 0 : i32
    %c0_i32_1 = arith.constant 0 : i32
    return %c0_i32, %c0_i32_0 : i32, i32
  }
  func.func @transform_4(%arg0: i32, %arg1: i32) -> (i32, i32) {
    %c0_i32 = arith.constant 0 : i32
    %c0_i32_0 = arith.constant 0 : i32
    return %arg0, %c0_i32 : i32, i32
  }
}

</mosaic_0001>

<llo_original>
// kernel: tpu_custom_call.1
$region0: #{tpu_custom_call.1}
  #allocation0 [shape = 'u32[]', space=smem, size = 0x4, offset = 0x4, fixed_abs, tag = 'smem constant byte address 0x4 - core index']
  #allocation1 [shape = 'u32[144,128]{1,0:T(1,128)}', space=vmem, size = 0x12000, scoped, tag = 'internal scratch']
  #allocation2 [shape = 'f32[16,128]{1,0:T(8,128)}', space=vmem, size = 0x2000, scoped, tag = 'scratch operand']
  %s0 = inlined_call_operand.hbm [shape: bf16[16,128], index: 0, kind: input, shape index: {}]
  %s1 = inlined_call_operand.hbm [shape: bf16[128,128], index: 1, kind: input, shape index: {}]
  %s2 = inlined_call_operand.vmem [shape: f32[1,128], index: 2, kind: input, shape index: {}]
  %s3 = inlined_call_operand.vmem [shape: f32[1,128], index: 3, kind: input, shape index: {}]
  %s4 = inlined_call_operand.hbm [shape: f32[16,128], index: 4, kind: output, shape index: {}]
  %s5 = sld [smem:[#allocation0]]
  $region42: #{tpu_custom_call.1} parent=0
    _
  %s7 = ssub.s32 1, %s5
  %s8 = scalar_select 0, %s7, %s5
  $region1: #{tpu_custom_call.1} parent=0
    #allocation3 [shape = 'u8[4096]{0}', space=vmem, size = 0x1000, scoped, tag = 'input window, operand 0, single buffered']
    #allocation4 [shape = 's32[1]{0}', space=sflag, size = 0x4, scoped, tag = 'scoped memory for tpu_custom_call.1']
    #allocation5 [shape = 's32[1]{0}', space=sflag, size = 0x4, scoped, tag = 'scoped memory for tpu_custom_call.1']
    #allocation6 [shape = 'u8[32768]{0}', space=vmem, size = 0x8000, scoped, tag = 'input window, operand 1, single buffered']
    #allocation7 [shape = 's32[1]{0}', space=sflag, size = 0x4, scoped, tag = 'scoped memory for tpu_custom_call.1']
    #allocation8 [shape = 'u8[8192]{0}', space=vmem, size = 0x2000, scoped, tag = 'output window, operand 0, single buffered']
    %9 = vsyncpa [#allocation4], 0
    %10 = vsyncpa [#allocation7], 0
    %11 = vsyncpa [#allocation5], 0
    // Predicated region
    $region2: #{tpu_custom_call.1} parent=1 // pred_check
      _
    $region3: #{tpu_custom_call.1} parent=1 // pred_check_branch
      %13 = sbr.rel (0) target = $region5
    $region4: #{tpu_custom_call.1} parent=1 // pred_region
      %s15 = ssub.s32 128, 128
      %16 = vsyncadd [#allocation4], %s15
      %s17 = sshll.u32 [#allocation3], 4
      %s18 = int_to_ptr.vmem [resolvable:$true] %s17
      %23 = dma.hbm_to_vmem [thread:$0]  %s0, 128, %s18, [#allocation4], 64, 64, 4
    $region5: #{tpu_custom_call.1} parent=1 // pred_fallthru
      _
    // Predicated region
    $region6: #{tpu_custom_call.1} parent=1 // pred_check
      _
    $region7: #{tpu_custom_call.1} parent=1 // pred_check_branch
      %25 = sbr.rel (0) target = $region9
    $region8: #{tpu_custom_call.1} parent=1 // pred_region
      %s27 = ssub.s32 1024, 1024
      %28 = vsyncadd [#allocation7], %s27
      %s29 = sshll.u32 [#allocation6], 4
      %s30 = int_to_ptr.vmem [resolvable:$true] %s29
      %35 = dma.hbm_to_vmem [thread:$0]  %s1, 1024, %s30, [#allocation7], 64, 64, 4
    $region9: #{tpu_custom_call.1} parent=1 // pred_fallthru
      _
    // Predicated region
    $region10: #{tpu_custom_call.1} parent=1 // pred_check
      _
    $region11: #{tpu_custom_call.1} parent=1 // pred_check_branch
      %37 = sbr.rel (0) target = $region13
    $region12: #{tpu_custom_call.1} parent=1 // pred_region
      _
    $region13: #{tpu_custom_call.1} parent=1 // pred_fallthru
      _
    // Predicated region
    $region14: #{tpu_custom_call.1} parent=1 // pred_check
      _
    $region15: #{tpu_custom_call.1} parent=1 // pred_check_branch
      %39 = sbr.rel (0) target = $region17
    $region16: #{tpu_custom_call.1} parent=1 // pred_region
      _
    $region17: #{tpu_custom_call.1} parent=1 // pred_fallthru
      _
    // Predicated region
    $region18: #{tpu_custom_call.1} parent=1 // pred_check
      _
    $region19: #{tpu_custom_call.1} parent=1 // pred_check_branch
      %41 = sbr.rel (0) target = $region21
    $region20: #{tpu_custom_call.1} parent=1 // pred_region
      %42 = dma.done [#allocation4], 128
    $region21: #{tpu_custom_call.1} parent=1 // pred_fallthru
      _
    // Predicated region
    $region22: #{tpu_custom_call.1} parent=1 // pred_check
      _
    $region23: #{tpu_custom_call.1} parent=1 // pred_check_branch
      %44 = sbr.rel (0) target = $region25
    $region24: #{tpu_custom_call.1} parent=1 // pred_region
      %45 = dma.done [#allocation7], 1024
    $region25: #{tpu_custom_call.1} parent=1 // pred_fallthru
      _
    %p47 = scmp.eq.s32.totalorder 0, 0
    // Predicated region
    $region26: #{tpu_custom_call.1} parent=1 // pred_check
      %p48 = pneg %p47
    $region27: #{tpu_custom_call.1} parent=1 // pred_check_branch
      %50 = sbr.rel (%p48) target = $region29
    $region28: #{tpu_custom_call.1} parent=1 // pred_region
      %51 = vst [vmem:[#allocation2] sm:$0xff] 0.0
      %52 = vst [vmem:[#allocation2 + $0x8] sm:$0xff] 0.0
    $region29: #{tpu_custom_call.1} parent=1 // pred_fallthru
      _
    %v53 = vld [vmem:[#allocation2] sm:$0xff]
    %v54 = vld [vmem:[#allocation2 + $0x8] sm:$0xff]
    %v55 = vld [vmem:[#allocation3] sm:$0xf]
    %v56 = vld [vmem:[#allocation3 + $0x4] sm:$0xf]
    %v57 = vld [vmem:[#allocation6] sm:$0xf]
    %v58 = vld [vmem:[#allocation6 + $0x4] sm:$0xf]
    %v59 = vld [vmem:[#allocation6 + $0x8] sm:$0xf]
    %v60 = vld [vmem:[#allocation6 + $0xc] sm:$0xf]
    %v61 = vld [vmem:[#allocation6 + $0x10] sm:$0xf]
    %v62 = vld [vmem:[#allocation6 + $0x14] sm:$0xf]
    %v63 = vld [vmem:[#allocation6 + $0x18] sm:$0xf]
    %v64 = vld [vmem:[#allocation6 + $0x1c] sm:$0xf]
    %v65 = vld [vmem:[#allocation6 + $0x20] sm:$0xf]
    %v66 = vld [vmem:[#allocation6 + $0x24] sm:$0xf]
    %v67 = vld [vmem:[#allocation6 + $0x28] sm:$0xf]
    %v68 = vld [vmem:[#allocation6 + $0x2c] sm:$0xf]
    %v69 = vld [vmem:[#allocation6 + $0x30] sm:$0xf]
    %v70 = vld [vmem:[#allocation6 + $0x34] sm:$0xf]
    %v71 = vld [vmem:[#allocation6 + $0x38] sm:$0xf]
    %v72 = vld [vmem:[#allocation6 + $0x3c] sm:$0xf]
    %v75 = vunpack.c.l.b16 %v55
    %v76 = vunpack.c.l.b16 %v56
    %v77 = vpack.c.b16 %v76, %v75
    %v95 = vunpack.c.l.b16 %v57
    %v96 = vunpack.c.l.b16 %v58
    %v97 = vunpack.c.l.b16 %v59
    %v98 = vunpack.c.l.b16 %v60
    %v99 = vunpack.c.l.b16 %v61
    %v100 = vunpack.c.l.b16 %v62
    %v101 = vunpack.c.l.b16 %v63
    %v102 = vunpack.c.l.b16 %v64
    %v103 = vunpack.c.l.b16 %v65
    %v104 = vunpack.c.l.b16 %v66
    %v105 = vunpack.c.l.b16 %v67
    %v106 = vunpack.c.l.b16 %v68
    %v107 = vunpack.c.l.b16 %v69
    %v108 = vunpack.c.l.b16 %v70
    %v109 = vunpack.c.l.b16 %v71
    %v110 = vunpack.c.l.b16 %v72
    %v111 = vpack.c.b16 %v96, %v95
    %v112 = vpack.c.b16 %v98, %v97
    %v113 = vpack.c.b16 %v100, %v99
    %v114 = vpack.c.b16 %v102, %v101
    %v115 = vpack.c.b16 %v104, %v103
    %v116 = vpack.c.b16 %v106, %v105
    %v117 = vpack.c.b16 %v108, %v107
    %v118 = vpack.c.b16 %v110, %v109
    %127 = vmatprep.subr.bf16.mxu0 0
    %128 = vmatpush1.bf16.msra.mxu0 %v118
    %129 = vmatprep.subr.bf16.mxu0 0
    %130 = vmatpush1.bf16.msra.mxu0 %v117
    %131 = vmatprep.subr.bf16.mxu0 0
    %132 = vmatpush1.bf16.msra.mxu0 %v116
    %133 = vmatprep.subr.bf16.mxu0 0
    %134 = vmatpush1.bf16.msra.mxu0 %v115
    %135 = vmatprep.subr.bf16.mxu0 0
    %136 = vmatpush1.bf16.msra.mxu0 %v114
    %137 = vmatprep.subr.bf16.mxu0 0
    %138 = vmatpush1.bf16.msra.mxu0 %v113
    %139 = vmatprep.subr.bf16.mxu0 0
    %140 = vmatpush1.bf16.msra.mxu0 %v112
    %141 = vmatprep.subr.bf16.mxu0 0
    %142 = vmatpush1.bf16.msra.mxu0 %v111
    %143 = vmatprep.subr.bf16.mxu0 0
    %144 = vmatpush2.bf16.msra.mxu0 0
    %145 = vmatprep.subr.bf16.mxu0 0
    %146 = vmatpush2.bf16.msra.mxu0 0
    %147 = vmatprep.subr.bf16.mxu0 0
    %148 = vmatpush2.bf16.msra.mxu0 0
    %149 = vmatprep.subr.bf16.mxu0 0
    %150 = vmatpush2.bf16.msra.mxu0 0
    %151 = vmatprep.subr.bf16.mxu0 0
    %152 = vmatpush2.bf16.msra.mxu0 0
    %153 = vmatprep.subr.bf16.mxu0 0
    %154 = vmatpush2.bf16.msra.mxu0 0
    %155 = vmatprep.subr.bf16.mxu0 0
    %156 = vmatpush2.bf16.msra.mxu0 0
    %157 = vmatprep.subr.bf16.mxu0 0
    %158 = vmatpush2.bf16.msra.mxu0 0
    %159 = vmatprep.mubr.bf16.mxu0 0
    %160 = vmatmul.mubr.bf16.gmra.mxu0 %v77
    %v161 = vpop.f32.mrf.mxu0
    %v162 = vadd.f32 0.0, %v161
    %v163 = vpop.f32.mrf.mxu0
    %v164 = vpop.f32.mrf.mxu0
    %v165 = vadd.f32 0.0, %v164
    %v166 = vpop.f32.mrf.mxu0
    %167 = vdwg.mxu0
    %v168 = vadd.f32 %v53, %v162
    %v169 = vadd.f32 %v54, %v165
    %170 = vst [vmem:[#allocation2] sm:$0xff] %v168
    %171 = vst [vmem:[#allocation2 + $0x8] sm:$0xff] %v169
    // Predicated region
    $region30: #{tpu_custom_call.1} parent=1 // pred_check
      %p172 = pneg %p47
    $region31: #{tpu_custom_call.1} parent=1 // pred_check_branch
      %174 = sbr.rel (%p172) target = $region33
    $region32: #{tpu_custom_call.1} parent=1 // pred_region
      %v175 = vld [vmem:[#allocation2] sm:$0xff]
      %v176 = vld [vmem:[#allocation2 + $0x8] sm:$0xff]
      %v177 = vlaneseq
      %v178 = vand.u32 %v177, 127
      %vm179 = vcmp.lt.s32.totalorder %v178, 64
      %v180 = vsel %vm179, %v175, 0.0
      %v181 = vsel %vm179, %v176, 0.0
      %182 = vadd.xlane.f32.xlu0 %v180
      %v183 = vpop.xlane.xlu0 %182
      %184 = vadd.xlane.f32.xlu0 %v181
      %v185 = vpop.xlane.xlu0 %184
      %v186 = vmul.f32 %v183, 0.015625
      %v187 = vmul.f32 %v185, 0.015625
      %v188 = vsub.f32 %v175, %v186
      %v189 = vsub.f32 %v176, %v187
      %v190 = vsel %vm179, %v188, 0.0
      %v191 = vsel %vm179, %v189, 0.0
      %v192 = vmul.f32 %v190, %v190
      %v193 = vmul.f32 %v191, %v191
      %194 = vadd.xlane.f32.xlu0 %v192
      %v195 = vpop.xlane.xlu0 %194
      %196 = vadd.xlane.f32.xlu0 %v193
      %v197 = vpop.xlane.xlu0 %196
      %v198 = vmul.f32 %v195, 0.015625
      %v199 = vmul.f32 %v197, 0.015625
      %v200 = vadd.f32 %v198, 1e-05
      %v201 = vadd.f32 %v199, 1e-05
      %v202 = vrsqrt.pop %v200
      %v203 = vrsqrt.pop %v201
      %v204 = vmul.f32 %v190, %v202
      %v205 = vmul.f32 %v191, %v203
      %v206 = vld [vmem:[%s2] sm:$0x1]
      %v208 = vlaneseq
      %v209 = vshrl.u32 %v208, 7
      %v210 = vsub.s32 0, %v209
      %v211 = vrot.slane %v206, %v210
      %v213 = vmul.f32 %v204, %v211
      %v214 = vmul.f32 %v205, %v211
      %v215 = vld [vmem:[%s3] sm:$0x1]
      %v217 = vlaneseq
      %v218 = vshrl.u32 %v217, 7
      %v219 = vsub.s32 0, %v218
      %v220 = vrot.slane %v215, %v219
      %v222 = vadd.f32 %v213, %v220
      %v223 = vadd.f32 %v214, %v220
      %224 = vst [vmem:[#allocation8] sm:$0xff] %v222
      %225 = vst [vmem:[#allocation8 + $0x8] sm:$0xff] %v223
    $region33: #{tpu_custom_call.1} parent=1 // pred_fallthru
      _
    // Predicated region
    $region34: #{tpu_custom_call.1} parent=1 // pred_check
      _
    $region35: #{tpu_custom_call.1} parent=1 // pred_check_branch
      %227 = sbr.rel (0) target = $region37
    $region36: #{tpu_custom_call.1} parent=1 // pred_region
      %s229 = ssub.s32 256, 256
      %230 = vsyncadd [#allocation5], %s229
      %s231 = sshll.u32 [#allocation8], 4
      %s232 = int_to_ptr.vmem [resolvable:$true] %s231
      %237 = dma.vmem_to_hbm [thread:$0]  %s232, 256, %s4, [#allocation5], 128, 128, 8
    $region37: #{tpu_custom_call.1} parent=1 // pred_fallthru
      _
    // Predicated region
    $region38: #{tpu_custom_call.1} parent=1 // pred_check
      _
    $region39: #{tpu_custom_call.1} parent=1 // pred_check_branch
      %239 = sbr.rel (0) target = $region41
    $region40: #{tpu_custom_call.1} parent=1 // pred_region
      %240 = dma.done [#allocation5], 256
    $region41: #{tpu_custom_call.1} parent=1 // pred_fallthru
      _
    %241 = vsyncpa [#allocation4], 1
    %242 = vsyncpa [#allocation7], 1
    %243 = vsyncpa [#allocation5], 1

</llo_original>
